<compile_context>
chip_gen: v7x
topology: tpu7x:2x2x1
jax: 0.10.0
libtpu: 0.0.40
codegen_flags: <defaults>
</compile_context>

<pallas_src>
import numpy as np
import jax
import jax.numpy as jnp
from jax.experimental import pallas as pl
from jax.experimental.pallas import tpu as pltpu


_MAX_ROW_TILE = 2048
_TARGET_DMAS = 8          # aim for this many concurrent DMAs in the DMA path
_ROW_CHUNK_ALIGN = 256    # multiple of every sublane pack factor (8/16/32)


def _cdiv(a, b):
    return -(-a // b)


def _round_up(a, b):
    return _cdiv(a, b) * b


def _result_dtype(dtypes):
    """Common dtype, clamped to 32-bit unless a 64-bit input is present."""
    dt = jnp.dtype(jnp.result_type(*dtypes))
    if dt.itemsize == 8 and dt.kind in "fiu" \
            and not any(jnp.dtype(d).itemsize == 8 for d in dtypes):
        dt = jnp.dtype(dt.kind + "4")   # f8->f4 (f32), i8->i4 (i32), u8->u4
    return dt


def _vmem_budget_and_limit():
    """(double-buffer tile budget, vmem_limit_bytes) per TPU generation."""
    try:
        info = pltpu.get_tpu_info()
        cap = int(getattr(info, "vmem_capacity_bytes", 0)) or (64 << 20)
    except Exception:
        cap = 64 << 20
    if cap >= (100 << 20):                 # v5e / v6e: 128 MiB physical VMEM
        return 72 << 20, 100 << 20
    return 28 << 20, 48 << 20              # v7x: 64 MiB physical VMEM


def _row_pack(dtypes):
    """Sublane pack factor for row-tile rounding (8 f32, 16 bf16, 32 int8)."""
    min_bytes = min(jnp.dtype(d).itemsize for d in dtypes)
    if min_bytes <= 1:
        return 32
    if min_bytes == 2:
        return 16
    return 8


def _choose_row_tile(n, widths, in_itemsizes, out_itemsize, budget, pack):
    """Largest row tile whose true double-buffered footprint fits the budget."""
    per_row = (2 * sum(w * s for w, s in zip(widths, in_itemsizes))
               + 2 * sum(widths) * out_itemsize)
    tb = budget // max(per_row, 1)
    tb = min(int(tb), _MAX_ROW_TILE)
    # Target >= 4 grid steps when the batch allows: pipeline overlap on all
    # chips and batch sharding across both TensorCores on v7x.
    tb = min(tb, _round_up(max(1, _cdiv(n, 4)), pack))
    tb = max(pack, (tb // pack) * pack)
    return min(tb, n)


# ---------------------------------------------------------------------------
# Path 1: direct HBM->HBM DMA (lane-tile-aligned slabs, no dtype mismatch).
# ---------------------------------------------------------------------------

def _dma_friendly(widths):
    return all(w > 0 and (w % 128 == 0) for w in widths)


def _row_chunks(n, num_inputs):
    """Static, 256-row-aligned chunks so several DMA engines run in parallel."""
    chunks = max(1, min(_TARGET_DMAS // max(num_inputs, 1), n // 1024))
    if chunks <= 1:
        return [0], [n]
    step = max(_ROW_CHUNK_ALIGN, _round_up(_cdiv(n, chunks), _ROW_CHUNK_ALIGN))
    starts, sizes = [], []
    r = 0
    while r < n:
        starts.append(r)
        sizes.append(min(step, n - r))
        r += step
    return starts, sizes


def _make_dma_concat_kernel(widths, row_starts, row_sizes):
    offsets = np.concatenate([[0], np.cumsum(widths)[:-1]]).tolist()
    n_in = len(widths)
    single_chunk = len(row_starts) == 1

    def kernel(*refs):
        in_refs = refs[:n_in]
        out_ref = refs[n_in]
        sem = refs[n_in + 1]
        copies = []
        d = 0
        for r, off, w in zip(in_refs, offsets, widths):
            if single_chunk:
                cp = pltpu.make_async_copy(
                    r, out_ref.at[:, pl.ds(off, w)], sem.at[d])
                cp.start()
                copies.append(cp)
                d += 1
            else:
                for r0, rc in zip(row_starts, row_sizes):
                    cp = pltpu.make_async_copy(
                        r.at[pl.ds(r0, rc), :],
                        out_ref.at[pl.ds(r0, rc), pl.ds(off, w)],
                        sem.at[d])
                    cp.start()
                    copies.append(cp)
                    d += 1
        for cp in copies:
            cp.wait()

    return kernel


def _concat_dma(xs2d, widths, n, total, out_dtype):
    # XLA pre-cast only the inputs that actually need promotion, then the
    # kernel is a pure strided HBM->HBM copy per slab.
    xs2d = [x if x.dtype == out_dtype else x.astype(out_dtype) for x in xs2d]
    row_starts, row_sizes = _row_chunks(n, len(xs2d))
    n_dmas = len(xs2d) * len(row_starts)
    kernel = _make_dma_concat_kernel(widths, row_starts, row_sizes)
    return pl.pallas_call(
        kernel,
        out_shape=jax.ShapeDtypeStruct((n, total), out_dtype),
        in_specs=[pl.BlockSpec(memory_space=pl.ANY) for _ in xs2d],
        out_specs=pl.BlockSpec(memory_space=pl.ANY),
        scratch_shapes=[pltpu.SemaphoreType.DMA((n_dmas,))],
    )(*xs2d)


# ---------------------------------------------------------------------------
# Path 2: BlockSpec-pipelined VMEM path (narrow / unaligned slabs).
# ---------------------------------------------------------------------------

def _make_vreg_concat_kernel(widths, out_dtype):
    offsets = np.concatenate([[0], np.cumsum(widths)[:-1]]).tolist()

    def kernel(*refs):
        out_ref = refs[-1]
        in_refs = refs[:-1]
        for r, off, w in zip(in_refs, offsets, widths):
            # In-kernel dtype promotion (free on the VPU relative to the DMA).
            # TODO(synk): non-128-aligned slabs still emit masked vst; making
            # them lane-dense needs a caller-visible padding/coalescing of the
            # output layout.
            out_ref[:, off:off + w] = r[...].astype(out_dtype)

    return kernel


def _concat_vreg(xs2d, widths, n, total, out_dtype, row_tile):
    budget, vmem_limit = _vmem_budget_and_limit()
    in_itemsizes = [jnp.dtype(x.dtype).itemsize for x in xs2d]
    out_itemsize = jnp.dtype(out_dtype).itemsize
    pack = _row_pack([x.dtype for x in xs2d] + [out_dtype])
    if row_tile is None:
        tb = _choose_row_tile(n, widths, in_itemsizes, out_itemsize,
                              budget, pack)
    else:
        tb = min(int(row_tile), n)

    kernel = _make_vreg_concat_kernel(widths, out_dtype)
    grid = (_cdiv(n, tb),)
    return pl.pallas_call(
        kernel,
        out_shape=jax.ShapeDtypeStruct((n, total), out_dtype),
        grid=grid,
        # Each input keeps its full (lane) width; only the batch axis is
        # tiled, so the (8,128) rule is satisfied (last dim == full dim).
        in_specs=[pl.BlockSpec((tb, w), lambda i: (i, 0)) for w in widths],
        out_specs=pl.BlockSpec((tb, total), lambda i: (i, 0)),
        compiler_params=pltpu.CompilerParams(
            dimension_semantics=("parallel",),
            vmem_limit_bytes=vmem_limit,
        ),
    )(*xs2d)


# ---------------------------------------------------------------------------
# Public wrapper: Concat.forward(*x)
# ---------------------------------------------------------------------------

def concat_pallas(*xs, row_tile=None):
    if len(xs) == 0:
        raise ValueError("Concat requires at least one input")
    out_dtype = _result_dtype([x.dtype for x in xs])

    rank = xs[0].ndim
    if any(x.ndim != rank for x in xs):
        raise ValueError(
            f"Concat: all inputs must have the same rank, got "
            f"{[x.ndim for x in xs]}")

    if rank == 1:
        # torch.stack(x, dim=1). Width-1 column blocks are lane-sparse in a
        # Pallas kernel (masked single-lane stores), so let XLA do the stack.
        if any(x.shape != xs[0].shape for x in xs):
            raise ValueError(
                f"Concat(stack): 1-D inputs must share shape, got "
                f"{[tuple(x.shape) for x in xs]}")
        return jnp.stack([x.astype(out_dtype) for x in xs], axis=1)

    # rank > 1: concat along dim=1; batch and trailing dims must match.
    n = xs[0].shape[0]
    trailing = xs[0].shape[2:]
    for x in xs:
        if x.shape[0] != n or x.shape[2:] != trailing:
            raise ValueError(
                f"Concat: inputs must share batch and trailing dims, got "
                f"{[tuple(x.shape) for x in xs]}")

    dim1_total = sum(x.shape[1] for x in xs)
    out_shape_final = (n, dim1_total) + trailing

    xs = [x for x in xs if x.shape[1] > 0]           # drop zero-width slabs
    if not xs:
        return jnp.zeros(out_shape_final, out_dtype)

    xs2d = [x.reshape(n, -1) for x in xs]
    widths = [x.shape[1] for x in xs2d]
    total = sum(widths)

    if _dma_friendly(widths):
        # Every destination column window is 128-lane aligned: pure strided
        # HBM->HBM DMA per slab (no VMEM round-trip, no masked stores).
        # TODO(synk): extend the direct-DMA path to non-128-aligned column
        # windows once unaligned-lane HBM destination windows are exercised.
        out2d = _concat_dma(xs2d, widths, n, total, out_dtype)
    else:
        out2d = _concat_vreg(xs2d, widths, n, total, out_dtype, row_tile)

    return out2d.reshape(out_shape_final)


if __name__ == "__main__":
    key = jax.random.PRNGKey(0)
    k1, k2, k3, k4, k5, k6, k7 = jax.random.split(key, 7)

    # Case 1: 2D tabular inputs, narrow/unaligned widths -> VMEM/vreg path.
    a = jax.random.normal(k1, (8, 32), dtype=jnp.float32)
    b = jax.random.normal(k2, (8, 16), dtype=jnp.float32)
    c = jax.random.normal(k3, (8, 48), dtype=jnp.float32)
    out = concat_pallas(a, b, c)
    jax.block_until_ready(out)
    ref = jnp.concatenate([a, b, c], axis=1)
    assert out.shape == ref.shape and bool(jnp.array_equal(out, ref))

    # Case 2: 4D NCHW inputs -> channel concat; flattened widths are
    # 128-aligned (1024, 768) -> direct HBM->HBM DMA path.
    x0 = jax.random.normal(k4, (2, 4, 16, 16), dtype=jnp.float32)
    x1 = jax.random.normal(k5, (2, 3, 16, 16), dtype=jnp.float32)
    out4 = concat_pallas(x0, x1)
    jax.block_until_ready(out4)
    ref4 = jnp.concatenate([x0, x1], axis=1)
    assert out4.shape == ref4.shape and bool(jnp.array_equal(out4, ref4))

    # Case 3: 1D inputs -> stack along dim=1 (XLA path).
    u = jnp.arange(8, dtype=jnp.float32)
    v = jnp.arange(8, dtype=jnp.float32) * 2.0
    outs = concat_pallas(u, v)
    jax.block_until_ready(outs)
    refs = jnp.stack([u, v], axis=1)
    assert outs.shape == refs.shape and bool(jnp.array_equal(outs, refs))

    # Case 4: mixed dtypes, narrow widths -> vreg path with in-kernel cast.
    m0 = jax.random.normal(k6, (8, 16), dtype=jnp.float32)
    m1 = jax.random.randint(k7, (8, 8), 0, 10, dtype=jnp.int32)
    outm = concat_pallas(m0, m1)
    jax.block_until_ready(outm)
    refm = jnp.concatenate([m0, m1.astype(jnp.float32)], axis=1)
    assert outm.dtype == refm.dtype and bool(jnp.array_equal(outm, refm))

    # Case 5: larger batch, 128-aligned widths -> DMA path with row chunking
    # (2 inputs x 2 chunks, last chunk partial-sized but exact, never OOB).
    g0 = jax.random.normal(k1, (2176, 128), dtype=jnp.float32)
    g1 = jax.random.normal(k2, (2176, 256), dtype=jnp.float32)
    outg = concat_pallas(g0, g1)
    jax.block_until_ready(outg)
    refg = jnp.concatenate([g0, g1], axis=1)
    assert outg.shape == refg.shape and bool(jnp.array_equal(outg, refg))

    # Case 6: unaligned widths with an explicit row tile -> vreg path with a
    # multi-step grid and a partial last tile (exercises the pipeline).
    h0 = jax.random.normal(k3, (600, 96), dtype=jnp.float32)
    h1 = jax.random.normal(k4, (600, 40), dtype=jnp.float32)
    outh = concat_pallas(h0, h1, row_tile=256)     # grid=(3,), last tile 88 rows
    jax.block_until_ready(outh)
    refh = jnp.concatenate([h0, h1], axis=1)
    assert outh.shape == refh.shape and bool(jnp.array_equal(outh, refh))

    print("KERNEL_OK")
</pallas_src>

<mosaic_0001>
module attributes {stable_mosaic.version = 11 : i64} {
  func.func @kernel(%arg0: i32, %arg1: memref<8x32xf32, #tpu.memory_space<vmem>>, %arg2: memref<8x16xf32, #tpu.memory_space<vmem>>, %arg3: memref<8x48xf32, #tpu.memory_space<vmem>>, %arg4: memref<8x96xf32, #tpu.memory_space<vmem>>) attributes {dimension_semantics = [#tpu.dimension_semantics<parallel>], iteration_bounds = array<i64: 1>, scalar_prefetch = 0 : i64, scratch_operands = 0 : i64, tpu.core_type = #tpu.core_type<tc>, window_params = [{transform_indices = @transform_0, window_bounds = array<i64: 8, 32>}, {transform_indices = @transform_1, window_bounds = array<i64: 8, 16>}, {transform_indices = @transform_2, window_bounds = array<i64: 8, 48>}, {transform_indices = @transform_3, window_bounds = array<i64: 8, 96>}]} {
    %c0 = arith.constant 0 : index
    %c0_0 = arith.constant 0 : index
    %0 = vector.load %arg1[%c0, %c0_0] : memref<8x32xf32, #tpu.memory_space<vmem>>, vector<8x32xf32>
    %c0_1 = arith.constant 0 : index
    %c0_2 = arith.constant 0 : index
    %1 = vector.load %arg4[%c0_1, %c0_2] : memref<8x96xf32, #tpu.memory_space<vmem>>, vector<8x32xf32>
    tpu.vector_store %arg4[%c0_1, %c0_2], %0 {strides = array<i32>} : memref<8x96xf32, #tpu.memory_space<vmem>>, vector<8x32xf32>,
    %c0_3 = arith.constant 0 : index
    %c0_4 = arith.constant 0 : index
    %2 = vector.load %arg2[%c0_3, %c0_4] : memref<8x16xf32, #tpu.memory_space<vmem>>, vector<8x16xf32>
    %c0_5 = arith.constant 0 : index
    %c32 = arith.constant 32 : index
    %3 = vector.load %arg4[%c0_5, %c32] : memref<8x96xf32, #tpu.memory_space<vmem>>, vector<8x16xf32>
    tpu.vector_store %arg4[%c0_5, %c32], %2 {strides = array<i32>} : memref<8x96xf32, #tpu.memory_space<vmem>>, vector<8x16xf32>,
    %c0_6 = arith.constant 0 : index
    %c0_7 = arith.constant 0 : index
    %4 = vector.load %arg3[%c0_6, %c0_7] : memref<8x48xf32, #tpu.memory_space<vmem>>, vector<8x48xf32>
    %c0_8 = arith.constant 0 : index
    %c48 = arith.constant 48 : index
    %5 = vector.load %arg4[%c0_8, %c48] : memref<8x96xf32, #tpu.memory_space<vmem>>, vector<8x48xf32>
    tpu.vector_store %arg4[%c0_8, %c48], %4 {strides = array<i32>} : memref<8x96xf32, #tpu.memory_space<vmem>>, vector<8x48xf32>,
    return
  }
  func.func @transform_0(%arg0: i32) -> (i32, i32) {
    %c0_i32 = arith.constant 0 : i32
    %c0_i32_0 = arith.constant 0 : i32
    return %arg0, %c0_i32 : i32, i32
  }
  func.func @transform_1(%arg0: i32) -> (i32, i32) {
    %c0_i32 = arith.constant 0 : i32
    %c0_i32_0 = arith.constant 0 : i32
    return %arg0, %c0_i32 : i32, i32
  }
  func.func @transform_2(%arg0: i32) -> (i32, i32) {
    %c0_i32 = arith.constant 0 : i32
    %c0_i32_0 = arith.constant 0 : i32
    return %arg0, %c0_i32 : i32, i32
  }
  func.func @transform_3(%arg0: i32) -> (i32, i32) {
    %c0_i32 = arith.constant 0 : i32
    %c0_i32_0 = arith.constant 0 : i32
    return %arg0, %c0_i32 : i32, i32
  }
}

</mosaic_0001>

<llo_original>
// kernel: tpu_custom_call.1
$region0: #{tpu_custom_call.1}
  #allocation0 [shape = 'u32[]', space=smem, size = 0x4, offset = 0x4, fixed_abs, tag = 'smem constant byte address 0x4 - core index']
  #allocation1 [shape = 'u32[144,128]{1,0:T(1,128)}', space=vmem, size = 0x12000, scoped, tag = 'internal scratch']
  %s0 = inlined_call_operand.hbm [shape: f32[8,32], index: 0, kind: input, shape index: {}]
  %s1 = inlined_call_operand.hbm [shape: f32[8,16], index: 1, kind: input, shape index: {}]
  %s2 = inlined_call_operand.hbm [shape: f32[8,48], index: 2, kind: input, shape index: {}]
  %s3 = inlined_call_operand.hbm [shape: f32[8,96], index: 3, kind: output, shape index: {}]
  %s4 = sld [smem:[#allocation0]]
  $region34: #{tpu_custom_call.1} parent=0
    _
  %s6 = ssub.s32 1, %s4
  %s7 = scalar_select 0, %s6, %s4
  $region1: #{tpu_custom_call.1} parent=0
    #allocation2 [shape = 'u8[4096]{0}', space=vmem, size = 0x1000, scoped, tag = 'input window, operand 0, single buffered']
    #allocation3 [shape = 's32[1]{0}', space=sflag, size = 0x4, scoped, tag = 'scoped memory for tpu_custom_call.1']
    #allocation4 [shape = 's32[1]{0}', space=sflag, size = 0x4, scoped, tag = 'scoped memory for tpu_custom_call.1']
    #allocation5 [shape = 'u8[4096]{0}', space=vmem, size = 0x1000, scoped, tag = 'input window, operand 1, single buffered']
    #allocation6 [shape = 's32[1]{0}', space=sflag, size = 0x4, scoped, tag = 'scoped memory for tpu_custom_call.1']
    #allocation7 [shape = 'u8[4096]{0}', space=vmem, size = 0x1000, scoped, tag = 'input window, operand 2, single buffered']
    #allocation8 [shape = 'u8[4096]{0}', space=vmem, size = 0x1000, scoped, tag = 'output window, operand 0, single buffered']
    %8 = vsyncpa [#allocation3], 0
    %9 = vsyncpa [#allocation6], 0
    %10 = vsyncpa [#allocation4], 0
    // Predicated region
    $region2: #{tpu_custom_call.1} parent=1 // pred_check
      _
    $region3: #{tpu_custom_call.1} parent=1 // pred_check_branch
      %12 = sbr.rel (0) target = $region5
    $region4: #{tpu_custom_call.1} parent=1 // pred_region
      %s14 = ssub.s32 128, 128
      %15 = vsyncadd [#allocation3], %s14
      %s17 = sshll.u32 [#allocation2], 4
      %s18 = int_to_ptr.vmem [resolvable:$true] %s17
      %20 = dma.hbm_to_vmem [thread:$0]  %s0, 128, %s18, [#allocation3]
    $region5: #{tpu_custom_call.1} parent=1 // pred_fallthru
      _
    // Predicated region
    $region6: #{tpu_custom_call.1} parent=1 // pred_check
      _
    $region7: #{tpu_custom_call.1} parent=1 // pred_check_branch
      %22 = sbr.rel (0) target = $region9
    $region8: #{tpu_custom_call.1} parent=1 // pred_region
      %s24 = ssub.s32 128, 128
      %25 = vsyncadd [#allocation6], %s24
      %s27 = sshll.u32 [#allocation5], 4
      %s28 = int_to_ptr.vmem [resolvable:$true] %s27
      %30 = dma.hbm_to_vmem [thread:$0]  %s1, 128, %s28, [#allocation6]
    $region9: #{tpu_custom_call.1} parent=1 // pred_fallthru
      _
    // Predicated region
    $region10: #{tpu_custom_call.1} parent=1 // pred_check
      _
    $region11: #{tpu_custom_call.1} parent=1 // pred_check_branch
      %32 = sbr.rel (0) target = $region13
    $region12: #{tpu_custom_call.1} parent=1 // pred_region
      %s34 = ssub.s32 128, 128
      %35 = vsyncadd [#allocation6], %s34
      %s37 = sshll.u32 [#allocation7], 4
      %s38 = int_to_ptr.vmem [resolvable:$true] %s37
      %40 = dma.hbm_to_vmem [thread:$0]  %s2, 128, %s38, [#allocation6]
    $region13: #{tpu_custom_call.1} parent=1 // pred_fallthru
      _
    // Predicated region
    $region14: #{tpu_custom_call.1} parent=1 // pred_check
      _
    $region15: #{tpu_custom_call.1} parent=1 // pred_check_branch
      %42 = sbr.rel (0) target = $region17
    $region16: #{tpu_custom_call.1} parent=1 // pred_region
      %43 = dma.done [#allocation3], 128
    $region17: #{tpu_custom_call.1} parent=1 // pred_fallthru
      _
    // Predicated region
    $region18: #{tpu_custom_call.1} parent=1 // pred_check
      _
    $region19: #{tpu_custom_call.1} parent=1 // pred_check_branch
      %45 = sbr.rel (0) target = $region21
    $region20: #{tpu_custom_call.1} parent=1 // pred_region
      %46 = dma.done [#allocation6], 128
    $region21: #{tpu_custom_call.1} parent=1 // pred_fallthru
      _
    // Predicated region
    $region22: #{tpu_custom_call.1} parent=1 // pred_check
      _
    $region23: #{tpu_custom_call.1} parent=1 // pred_check_branch
      %48 = sbr.rel (0) target = $region25
    $region24: #{tpu_custom_call.1} parent=1 // pred_region
      %49 = dma.done [#allocation6], 128
    $region25: #{tpu_custom_call.1} parent=1 // pred_fallthru
      _
    %v50 = vld [vmem:[#allocation2] sm:$0xff]
    %vm51 = vcmask 261120
    %52 = vst.msk [vmem:[#allocation8] sm:$0xff] %vm51, %v50
    %v53 = vld [vmem:[#allocation5] sm:$0xff]
    %55 = vrot.lane.b32.xlu0 %v53, 32
    %v56 = vpop.permute.xlu0 %55
    %vm58 = vcmask 392448
    %59 = vst.msk [vmem:[#allocation8] sm:$0xff] %vm58, %v56
    %v60 = vld [vmem:[#allocation7] sm:$0xff]
    %62 = vrot.lane.b32.xlu0 %v60, 48
    %v63 = vpop.permute.xlu0 %62
    %vm65 = vcmask 785792
    %66 = vst.msk [vmem:[#allocation8] sm:$0xff] %vm65, %v63
    // Predicated region
    $region26: #{tpu_custom_call.1} parent=1 // pred_check
      _
    $region27: #{tpu_custom_call.1} parent=1 // pred_check_branch
      %68 = sbr.rel (0) target = $region29
    $region28: #{tpu_custom_call.1} parent=1 // pred_region
      %s70 = ssub.s32 128, 128
      %71 = vsyncadd [#allocation4], %s70
      %s73 = sshll.u32 [#allocation8], 4
      %s74 = int_to_ptr.vmem [resolvable:$true] %s73
      %76 = dma.vmem_to_hbm [thread:$0]  %s74, 128, %s3, [#allocation4]
    $region29: #{tpu_custom_call.1} parent=1 // pred_fallthru
      _
    // Predicated region
    $region30: #{tpu_custom_call.1} parent=1 // pred_check
      _
    $region31: #{tpu_custom_call.1} parent=1 // pred_check_branch
      %78 = sbr.rel (0) target = $region33
    $region32: #{tpu_custom_call.1} parent=1 // pred_region
      %79 = dma.done [#allocation4], 128
    $region33: #{tpu_custom_call.1} parent=1 // pred_fallthru
      _
    %80 = vsyncpa [#allocation3], 1
    %81 = vsyncpa [#allocation6], 1
    %82 = vsyncpa [#allocation4], 1

</llo_original>
